<compile_context>
chip_gen: v5e
topology: v5e:2x2
jax: 0.10.0
libtpu: 0.0.40
codegen_flags: <defaults>
</compile_context>

<pallas_src>
import functools

import jax
import jax.numpy as jnp
from jax.experimental import pallas as pl
from jax.experimental.pallas import tpu as pltpu

LEAKY_SLOPE = 0.2


# ----------------------------- Pallas kernel ------------------------------- #

def _conv_taps_kernel(w_ref, b_ref, x_ref, o_ref, *, taps, cin, lout):
    """One image: out = leaky_relu( sum_taps  W_tap @ window_tap  +  b ).

    x_ref : (1, s*s*Cin, Hph*Wph) bf16  -- phase-decomposed padded image, VMEM resident
    w_ref : (KH*KW, Cout, Cin)    bf16
    b_ref : (Cout, 1)             f32
    o_ref : (1, Cout, OH*Wph)     f32   -- lane axis = flattened (oh, w') spatial
    Each tap's window is a static 2-D slice of x_ref, so patch assembly happens on the fly
    (no im2col, no in-kernel reshape, no dynamic lane offsets).
    """
    acc = None
    for k, (c0, l0) in enumerate(taps):                        # statically unrolled taps
        win = x_ref[0, pl.ds(c0, cin), pl.ds(l0, lout)]        # (Cin, Lout) bf16
        part = jnp.dot(w_ref[k], win, preferred_element_type=jnp.float32)
        acc = part if acc is None else acc + part
    y = acc + b_ref[...]                                       # bias broadcast over lanes
    o_ref[0] = jnp.where(y >= 0.0, y, LEAKY_SLOPE * y)


# ------------------------------ glue helpers ------------------------------- #

def _round_up(x, m):
    return ((x + m - 1) // m) * m


def _vmem_budget_bytes():
    """~3/4 of physical VMEM: ~48 MiB-class on v7x, up to 96 MiB on v5e/v6e."""
    try:
        cap = int(pltpu.get_tpu_info().vmem_capacity_bytes)
    except Exception:
        cap = 64 * 1024 * 1024            # conservative fallback (v7x-sized)
    return max(32 * 1024 * 1024, min(cap * 3 // 4, 96 * 1024 * 1024))


def spectral_normalize(w, key, eps=1e-12):
    """One power iteration (PyTorch spectral_norm training-forward semantics)."""
    cout = w.shape[0]
    w_mat = w.reshape(cout, -1)
    u = jax.random.normal(key, (cout,), dtype=w.dtype)
    u = u / jnp.maximum(jnp.linalg.norm(u), eps)
    v = w_mat.T @ u
    v = v / jnp.maximum(jnp.linalg.norm(v), eps)
    u = w_mat @ v
    u = u / jnp.maximum(jnp.linalg.norm(u), eps)
    sigma = u @ (w_mat @ v)
    return w / sigma


# ------------------------------ forward pass ------------------------------- #

@functools.partial(jax.jit, static_argnames=("stride", "padding", "dilation"))
def sn_conv_forward(x_nchw, w, b, *, stride=1, padding=0, dilation=1):
    """LeakyReLU(Conv2d(x; spectral-normalized w, b)) as a single fused Pallas kernel."""
    N, Cin, H, W = x_nchw.shape
    Cout, _, KH, KW = w.shape
    s, d, p = stride, dilation, padding

    OH = (H + 2 * p - d * (KH - 1) - 1) // s + 1
    OW = (W + 2 * p - d * (KW - 1) - 1) // s + 1
    qi_max = (d * (KH - 1)) // s
    qj_max = (d * (KW - 1)) // s
    Wph = OW + qj_max                                # per-row width kept inside the kernel
    Hph = OH + qi_max + (1 if qj_max > 0 else 0)     # +1 slack row: flat windows may run past
    Lsp = Hph * Wph                                  # flattened input spatial (lane axis)
    Lout = OH * Wph                                  # flattened output spatial (lane axis)
    SC = s * s * Cin                                 # phase-decomposed channel count

    # Input prep: bf16 cast, conv zero-pad, pad/crop to the phase grid, one space-to-depth
    # transpose (degenerates to free reshapes when stride == 1).  No im2col.
    xb = x_nchw.astype(jnp.bfloat16)
    Hp0, Wp0 = H + 2 * p, W + 2 * p
    xpad = jnp.pad(xb, ((0, 0), (0, 0),
                        (p, p + max(0, s * Hph - Hp0)),
                        (p, p + max(0, s * Wph - Wp0))))
    xpad = xpad[:, :, :s * Hph, :s * Wph]            # crop never touches rows valid outputs read
    xph = xpad.reshape(N, Cin, Hph, s, Wph, s)
    xph = xph.transpose(0, 3, 5, 1, 2, 4)            # (N, s, s, Cin, Hph, Wph)
    xph = xph.reshape(N, SC, Lsp)

    # Per-tap static offsets: channel block (phase) + lane offset inside the flat image.
    taps = []
    for i in range(KH):
        for j in range(KW):
            ph, qi = (i * d) % s, (i * d) // s
            pw, qj = (j * d) % s, (j * d) // s
            taps.append(((ph * s + pw) * Cin, qi * Wph + qj))

    w_k = w.transpose(2, 3, 0, 1).reshape(KH * KW, Cout, Cin).astype(jnp.bfloat16)
    b_col = b.reshape(Cout, 1).astype(jnp.float32)

    # VMEM feasibility (padded layouts, double-buffered blocks) against the chip budget.
    budget = _vmem_budget_bytes()
    need = (2 * _round_up(SC, 16) * _round_up(Lsp, 128) * 2        # input block x2 (bf16)
            + 2 * _round_up(Cout, 8) * _round_up(Lout, 128) * 4    # output block x2 (f32)
            + _round_up(Cout, 8) * _round_up(Lout, 128) * 4        # f32 accumulator value
            + 2 * _round_up(Cin, 16) * _round_up(Lout, 128) * 2    # ~2 live tap windows
            + 8192)                                                # weights / bias / slack
    if need > budget:
        # TODO(synk): add halo'd OH-band tiling (or a Cin-split accumulator) for huge images.
        raise NotImplementedError(
            f"per-image block ({need} B) exceeds VMEM budget ({budget} B)")

    kernel = functools.partial(_conv_taps_kernel, taps=tuple(taps), cin=Cin, lout=Lout)

    cost = pl.CostEstimate(
        flops=2 * N * KH * KW * Cout * Cin * Lout,
        transcendentals=0,
        bytes_accessed=(N * SC * Lsp * 2 + N * Cout * Lout * 4
                        + KH * KW * Cout * Cin * 2 + Cout * 4),
    )

    out = pl.pallas_call(
        kernel,
        out_shape=jax.ShapeDtypeStruct((N, Cout, Lout), jnp.float32),
        grid_spec=pltpu.PrefetchScalarGridSpec(
            num_scalar_prefetch=0,
            grid=(N,),                                             # one image per step
            in_specs=[
                pl.BlockSpec((KH * KW, Cout, Cin), lambda n: (0, 0, 0)),  # weights (invariant)
                pl.BlockSpec((Cout, 1), lambda n: (0, 0)),                # bias    (invariant)
                pl.BlockSpec((1, SC, Lsp), lambda n: (n, 0, 0)),          # image, DMA'd once
            ],
            out_specs=pl.BlockSpec((1, Cout, Lout), lambda n: (n, 0, 0)),
        ),
        compiler_params=pltpu.CompilerParams(
            dimension_semantics=("parallel",),     # images independent -> v7x 2-TC sharding
            vmem_limit_bytes=budget,
        ),
        cost_estimate=cost,
    )(w_k, b_col, xph)

    # Drop the (Wph - OW) garbage columns per output row; already (N, Cout, ...) -> no transpose.
    return out.reshape(N, Cout, OH, Wph)[:, :, :, :OW]


# ----------------------------- pure-JAX reference --------------------------- #

def reference_forward(x_nchw, w, b, stride, padding, dilation, cast_bf16):
    dn = ("NCHW", "OIHW", "NCHW")
    xc = x_nchw.astype(jnp.bfloat16) if cast_bf16 else x_nchw
    wc = w.astype(jnp.bfloat16) if cast_bf16 else w
    y = jax.lax.conv_general_dilated(
        xc, wc, (stride, stride), [(padding, padding)] * 2,
        rhs_dilation=(dilation, dilation), dimension_numbers=dn,
        preferred_element_type=jnp.float32)
    y = y + b.reshape(1, -1, 1, 1)
    return jnp.where(y >= 0, y, LEAKY_SLOPE * y)


# ---------------------------------- main ------------------------------------ #

if __name__ == "__main__":
    key = jax.random.PRNGKey(0)
    k_x, k_w, k_b, k_u = jax.random.split(key, 4)

    # Small config consistent with the PyTorch module.
    N, Cin, H, W = 2, 4, 16, 16
    Cout, KH, KW = 8, 3, 3

    x = jax.random.normal(k_x, (N, Cin, H, W), dtype=jnp.float32)

    # kaiming_normal_ (fan_in, a=0): std = sqrt(2 / fan_in)
    fan_in = Cin * KH * KW
    w = jax.random.normal(k_w, (Cout, Cin, KH, KW), jnp.float32) * (2.0 / fan_in) ** 0.5
    # Conv2d default bias init: U(-1/sqrt(fan_in), 1/sqrt(fan_in))
    bound = 1.0 / (fan_in ** 0.5)
    b = jax.random.uniform(k_b, (Cout,), jnp.float32, -bound, bound)

    # spectral_norm on the conv weight (one power iteration, deterministic u)
    w_sn = spectral_normalize(w, k_u)

    # Two configs: stride-1/pad-1 (lane-dense path) and stride-2/pad-0 (phase-decomposed path).
    for stride, padding, dilation in ((1, 1, 1), (2, 0, 1)):
        out = sn_conv_forward(x, w_sn, b, stride=stride, padding=padding, dilation=dilation)
        out = jax.block_until_ready(out)

        ref_bf16 = reference_forward(x, w_sn, b, stride, padding, dilation, cast_bf16=True)
        ref_f32 = reference_forward(x, w_sn, b, stride, padding, dilation, cast_bf16=False)

        if out.shape != ref_f32.shape:
            raise AssertionError(f"shape mismatch {out.shape} vs {ref_f32.shape}")
        if not jnp.allclose(out, ref_bf16, atol=1e-2, rtol=1e-2):
            raise AssertionError(f"Pallas mismatch vs bf16 reference (s={stride},p={padding})")
        if not jnp.allclose(out, ref_f32, atol=6e-2, rtol=6e-2):
            raise AssertionError(f"Pallas mismatch vs f32 reference (s={stride},p={padding})")

    print("KERNEL_OK")
</pallas_src>

<mosaic_0001>
module attributes {stable_mosaic.version = 11 : i64} {
  func.func @_conv_taps_kernel(%arg0: i32, %arg1: memref<9x8x4xbf16, #tpu.memory_space<vmem>>, %arg2: memref<8x1xf32, #tpu.memory_space<vmem>>, %arg3: memref<1x4x342xbf16, #tpu.memory_space<vmem>>, %arg4: memref<1x8x288xf32, #tpu.memory_space<vmem>>) attributes {dimension_semantics = [#tpu.dimension_semantics<parallel>], iteration_bounds = array<i64: 2>, scalar_prefetch = 0 : i64, scratch_operands = 0 : i64, tpu.core_type = #tpu.core_type<tc>, window_params = [{pipeline_mode = #tpu.pipeline_mode<synchronous>, transform_indices = @transform_0, window_bounds = array<i64: 9, 8, 4>}, {pipeline_mode = #tpu.pipeline_mode<synchronous>, transform_indices = @transform_1, window_bounds = array<i64: 8, 1>}, {transform_indices = @transform_2, window_bounds = array<i64: 1, 4, 342>}, {transform_indices = @transform_3, window_bounds = array<i64: 1, 8, 288>}]} {
    %c0 = arith.constant 0 : index
    %c0_0 = arith.constant 0 : index
    %c0_1 = arith.constant 0 : index
    %0 = vector.load %arg3[%c0, %c0_0, %c0_1] : memref<1x4x342xbf16, #tpu.memory_space<vmem>>, vector<1x4x288xbf16>
    %1 = vector.shape_cast %0 : vector<1x4x288xbf16> to vector<4x288xbf16>
    %c0_2 = arith.constant 0 : index
    %c0_3 = arith.constant 0 : index
    %c0_4 = arith.constant 0 : index
    %2 = vector.load %arg1[%c0_2, %c0_3, %c0_4] : memref<9x8x4xbf16, #tpu.memory_space<vmem>>, vector<1x8x4xbf16>
    %3 = vector.shape_cast %2 : vector<1x8x4xbf16> to vector<8x4xbf16>
    %cst = arith.constant dense<0.000000e+00> : vector<8x288xf32>
    %4 = tpu.matmul %3, %1, %cst {dimension_numbers = #tpu.dot_dimension_numbers<[1], [0], [0], [1], [0, 0, 1, 1], [], []>} : vector<8x4xbf16>, vector<4x288xbf16>, vector<8x288xf32> -> vector<8x288xf32>
    %c0_5 = arith.constant 0 : index
    %c0_6 = arith.constant 0 : index
    %c1 = arith.constant 1 : index
    %5 = vector.load %arg3[%c0_5, %c0_6, %c1] : memref<1x4x342xbf16, #tpu.memory_space<vmem>>, vector<1x4x288xbf16>
    %6 = vector.shape_cast %5 : vector<1x4x288xbf16> to vector<4x288xbf16>
    %c1_7 = arith.constant 1 : index
    %c0_8 = arith.constant 0 : index
    %c0_9 = arith.constant 0 : index
    %7 = vector.load %arg1[%c1_7, %c0_8, %c0_9] : memref<9x8x4xbf16, #tpu.memory_space<vmem>>, vector<1x8x4xbf16>
    %8 = vector.shape_cast %7 : vector<1x8x4xbf16> to vector<8x4xbf16>
    %cst_10 = arith.constant dense<0.000000e+00> : vector<8x288xf32>
    %9 = tpu.matmul %8, %6, %cst_10 {dimension_numbers = #tpu.dot_dimension_numbers<[1], [0], [0], [1], [0, 0, 1, 1], [], []>} : vector<8x4xbf16>, vector<4x288xbf16>, vector<8x288xf32> -> vector<8x288xf32>
    %10 = arith.addf %4, %9 : vector<8x288xf32>
    %c0_11 = arith.constant 0 : index
    %c0_12 = arith.constant 0 : index
    %c2 = arith.constant 2 : index
    %11 = vector.load %arg3[%c0_11, %c0_12, %c2] : memref<1x4x342xbf16, #tpu.memory_space<vmem>>, vector<1x4x288xbf16>
    %12 = vector.shape_cast %11 : vector<1x4x288xbf16> to vector<4x288xbf16>
    %c2_13 = arith.constant 2 : index
    %c0_14 = arith.constant 0 : index
    %c0_15 = arith.constant 0 : index
    %13 = vector.load %arg1[%c2_13, %c0_14, %c0_15] : memref<9x8x4xbf16, #tpu.memory_space<vmem>>, vector<1x8x4xbf16>
    %14 = vector.shape_cast %13 : vector<1x8x4xbf16> to vector<8x4xbf16>
    %cst_16 = arith.constant dense<0.000000e+00> : vector<8x288xf32>
    %15 = tpu.matmul %14, %12, %cst_16 {dimension_numbers = #tpu.dot_dimension_numbers<[1], [0], [0], [1], [0, 0, 1, 1], [], []>} : vector<8x4xbf16>, vector<4x288xbf16>, vector<8x288xf32> -> vector<8x288xf32>
    %16 = arith.addf %10, %15 : vector<8x288xf32>
    %c0_17 = arith.constant 0 : index
    %c0_18 = arith.constant 0 : index
    %c18 = arith.constant 18 : index
    %17 = vector.load %arg3[%c0_17, %c0_18, %c18] : memref<1x4x342xbf16, #tpu.memory_space<vmem>>, vector<1x4x288xbf16>
    %18 = vector.shape_cast %17 : vector<1x4x288xbf16> to vector<4x288xbf16>
    %c3 = arith.constant 3 : index
    %c0_19 = arith.constant 0 : index
    %c0_20 = arith.constant 0 : index
    %19 = vector.load %arg1[%c3, %c0_19, %c0_20] : memref<9x8x4xbf16, #tpu.memory_space<vmem>>, vector<1x8x4xbf16>
    %20 = vector.shape_cast %19 : vector<1x8x4xbf16> to vector<8x4xbf16>
    %cst_21 = arith.constant dense<0.000000e+00> : vector<8x288xf32>
    %21 = tpu.matmul %20, %18, %cst_21 {dimension_numbers = #tpu.dot_dimension_numbers<[1], [0], [0], [1], [0, 0, 1, 1], [], []>} : vector<8x4xbf16>, vector<4x288xbf16>, vector<8x288xf32> -> vector<8x288xf32>
    %22 = arith.addf %16, %21 : vector<8x288xf32>
    %c0_22 = arith.constant 0 : index
    %c0_23 = arith.constant 0 : index
    %c19 = arith.constant 19 : index
    %23 = vector.load %arg3[%c0_22, %c0_23, %c19] : memref<1x4x342xbf16, #tpu.memory_space<vmem>>, vector<1x4x288xbf16>
    %24 = vector.shape_cast %23 : vector<1x4x288xbf16> to vector<4x288xbf16>
    %c4 = arith.constant 4 : index
    %c0_24 = arith.constant 0 : index
    %c0_25 = arith.constant 0 : index
    %25 = vector.load %arg1[%c4, %c0_24, %c0_25] : memref<9x8x4xbf16, #tpu.memory_space<vmem>>, vector<1x8x4xbf16>
    %26 = vector.shape_cast %25 : vector<1x8x4xbf16> to vector<8x4xbf16>
    %cst_26 = arith.constant dense<0.000000e+00> : vector<8x288xf32>
    %27 = tpu.matmul %26, %24, %cst_26 {dimension_numbers = #tpu.dot_dimension_numbers<[1], [0], [0], [1], [0, 0, 1, 1], [], []>} : vector<8x4xbf16>, vector<4x288xbf16>, vector<8x288xf32> -> vector<8x288xf32>
    %28 = arith.addf %22, %27 : vector<8x288xf32>
    %c0_27 = arith.constant 0 : index
    %c0_28 = arith.constant 0 : index
    %c20 = arith.constant 20 : index
    %29 = vector.load %arg3[%c0_27, %c0_28, %c20] : memref<1x4x342xbf16, #tpu.memory_space<vmem>>, vector<1x4x288xbf16>
    %30 = vector.shape_cast %29 : vector<1x4x288xbf16> to vector<4x288xbf16>
    %c5 = arith.constant 5 : index
    %c0_29 = arith.constant 0 : index
    %c0_30 = arith.constant 0 : index
    %31 = vector.load %arg1[%c5, %c0_29, %c0_30] : memref<9x8x4xbf16, #tpu.memory_space<vmem>>, vector<1x8x4xbf16>
    %32 = vector.shape_cast %31 : vector<1x8x4xbf16> to vector<8x4xbf16>
    %cst_31 = arith.constant dense<0.000000e+00> : vector<8x288xf32>
    %33 = tpu.matmul %32, %30, %cst_31 {dimension_numbers = #tpu.dot_dimension_numbers<[1], [0], [0], [1], [0, 0, 1, 1], [], []>} : vector<8x4xbf16>, vector<4x288xbf16>, vector<8x288xf32> -> vector<8x288xf32>
    %34 = arith.addf %28, %33 : vector<8x288xf32>
    %c0_32 = arith.constant 0 : index
    %c0_33 = arith.constant 0 : index
    %c36 = arith.constant 36 : index
    %35 = vector.load %arg3[%c0_32, %c0_33, %c36] : memref<1x4x342xbf16, #tpu.memory_space<vmem>>, vector<1x4x288xbf16>
    %36 = vector.shape_cast %35 : vector<1x4x288xbf16> to vector<4x288xbf16>
    %c6 = arith.constant 6 : index
    %c0_34 = arith.constant 0 : index
    %c0_35 = arith.constant 0 : index
    %37 = vector.load %arg1[%c6, %c0_34, %c0_35] : memref<9x8x4xbf16, #tpu.memory_space<vmem>>, vector<1x8x4xbf16>
    %38 = vector.shape_cast %37 : vector<1x8x4xbf16> to vector<8x4xbf16>
    %cst_36 = arith.constant dense<0.000000e+00> : vector<8x288xf32>
    %39 = tpu.matmul %38, %36, %cst_36 {dimension_numbers = #tpu.dot_dimension_numbers<[1], [0], [0], [1], [0, 0, 1, 1], [], []>} : vector<8x4xbf16>, vector<4x288xbf16>, vector<8x288xf32> -> vector<8x288xf32>
    %40 = arith.addf %34, %39 : vector<8x288xf32>
    %c0_37 = arith.constant 0 : index
    %c0_38 = arith.constant 0 : index
    %c37 = arith.constant 37 : index
    %41 = vector.load %arg3[%c0_37, %c0_38, %c37] : memref<1x4x342xbf16, #tpu.memory_space<vmem>>, vector<1x4x288xbf16>
    %42 = vector.shape_cast %41 : vector<1x4x288xbf16> to vector<4x288xbf16>
    %c7 = arith.constant 7 : index
    %c0_39 = arith.constant 0 : index
    %c0_40 = arith.constant 0 : index
    %43 = vector.load %arg1[%c7, %c0_39, %c0_40] : memref<9x8x4xbf16, #tpu.memory_space<vmem>>, vector<1x8x4xbf16>
    %44 = vector.shape_cast %43 : vector<1x8x4xbf16> to vector<8x4xbf16>
    %cst_41 = arith.constant dense<0.000000e+00> : vector<8x288xf32>
    %45 = tpu.matmul %44, %42, %cst_41 {dimension_numbers = #tpu.dot_dimension_numbers<[1], [0], [0], [1], [0, 0, 1, 1], [], []>} : vector<8x4xbf16>, vector<4x288xbf16>, vector<8x288xf32> -> vector<8x288xf32>
    %46 = arith.addf %40, %45 : vector<8x288xf32>
    %c0_42 = arith.constant 0 : index
    %c0_43 = arith.constant 0 : index
    %c38 = arith.constant 38 : index
    %47 = vector.load %arg3[%c0_42, %c0_43, %c38] : memref<1x4x342xbf16, #tpu.memory_space<vmem>>, vector<1x4x288xbf16>
    %48 = vector.shape_cast %47 : vector<1x4x288xbf16> to vector<4x288xbf16>
    %c8 = arith.constant 8 : index
    %c0_44 = arith.constant 0 : index
    %c0_45 = arith.constant 0 : index
    %49 = vector.load %arg1[%c8, %c0_44, %c0_45] : memref<9x8x4xbf16, #tpu.memory_space<vmem>>, vector<1x8x4xbf16>
    %50 = vector.shape_cast %49 : vector<1x8x4xbf16> to vector<8x4xbf16>
    %cst_46 = arith.constant dense<0.000000e+00> : vector<8x288xf32>
    %51 = tpu.matmul %50, %48, %cst_46 {dimension_numbers = #tpu.dot_dimension_numbers<[1], [0], [0], [1], [0, 0, 1, 1], [], []>} : vector<8x4xbf16>, vector<4x288xbf16>, vector<8x288xf32> -> vector<8x288xf32>
    %52 = arith.addf %46, %51 : vector<8x288xf32>
    %c0_47 = arith.constant 0 : index
    %c0_48 = arith.constant 0 : index
    %53 = vector.load %arg2[%c0_47, %c0_48] : memref<8x1xf32, #tpu.memory_space<vmem>>, vector<8x1xf32>
    %54 = vector.broadcast %53 : vector<8x1xf32> to vector<8x288xf32>
    %55 = arith.addf %52, %54 : vector<8x288xf32>
    %cst_49 = arith.constant 0.000000e+00 : f32
    %56 = vector.broadcast %cst_49 : f32 to vector<8x288xf32>
    %57 = arith.cmpf oge, %55, %56 : vector<8x288xf32>
    %cst_50 = arith.constant 2.000000e-01 : f32
    %58 = vector.broadcast %cst_50 : f32 to vector<8x288xf32>
    %59 = arith.mulf %58, %55 : vector<8x288xf32>
    %60 = arith.select %57, %55, %59 : vector<8x288xi1>, vector<8x288xf32>
    %c0_51 = arith.constant 0 : index
    %c0_52 = arith.constant 0 : index
    %c0_53 = arith.constant 0 : index
    %61 = vector.load %arg4[%c0_51, %c0_52, %c0_53] : memref<1x8x288xf32, #tpu.memory_space<vmem>>, vector<1x8x288xf32>
    %62 = vector.shape_cast %61 : vector<1x8x288xf32> to vector<8x288xf32>
    %63 = vector.shape_cast %60 : vector<8x288xf32> to vector<1x8x288xf32>
    tpu.vector_store %arg4[%c0_51, %c0_52, %c0_53], %63 {strides = array<i32>} : memref<1x8x288xf32, #tpu.memory_space<vmem>>, vector<1x8x288xf32>,
    return
  }
  func.func @transform_0(%arg0: i32) -> (i32, i32, i32) {
    %c0_i32 = arith.constant 0 : i32
    %c0_i32_0 = arith.constant 0 : i32
    %c0_i32_1 = arith.constant 0 : i32
    %c0_i32_2 = arith.constant 0 : i32
    return %c0_i32, %c0_i32_0, %c0_i32_1 : i32, i32, i32
  }
  func.func @transform_1(%arg0: i32) -> (i32, i32) {
    %c0_i32 = arith.constant 0 : i32
    %c0_i32_0 = arith.constant 0 : i32
    %c0_i32_1 = arith.constant 0 : i32
    return %c0_i32, %c0_i32_0 : i32, i32
  }
  func.func @transform_2(%arg0: i32) -> (i32, i32, i32) {
    %c0_i32 = arith.constant 0 : i32
    %c0_i32_0 = arith.constant 0 : i32
    %c0_i32_1 = arith.constant 0 : i32
    return %arg0, %c0_i32, %c0_i32_0 : i32, i32, i32
  }
  func.func @transform_3(%arg0: i32) -> (i32, i32, i32) {
    %c0_i32 = arith.constant 0 : i32
    %c0_i32_0 = arith.constant 0 : i32
    %c0_i32_1 = arith.constant 0 : i32
    return %arg0, %c0_i32, %c0_i32_0 : i32, i32, i32
  }
}

</mosaic_0001>

<llo_original>
// kernel: sn_conv_forward.1
$region0: #{sn_conv_forward.1}
  #allocation0 [shape = 'u32[]', space=smem, size = 0x4, offset = 0x4, fixed_abs, tag = 'smem constant byte address 0x4 - core index']
  #allocation1 [shape = 'u32[72,128]{1,0:T(1,128)}', space=vmem, size = 0x9000, scoped, tag = 'internal scratch']
  %s0 = inlined_call_operand.vmem [shape: bf16[9,8,4], index: 0, kind: input, shape index: {}]
  %s1 = inlined_call_operand.vmem [shape: f32[8,1], index: 1, kind: input, shape index: {}]
  %s2 = inlined_call_operand.vmem [shape: bf16[2,4,342], index: 2, kind: input, shape index: {}]
  %s3 = inlined_call_operand.vmem [shape: f32[2,8,288], index: 3, kind: output, shape index: {}]
  %s4 = sld [smem:[#allocation0]]
  $region45: #{sn_conv_forward.1} parent=0
    _
  %s6 = ssub.s32 1, %s4
  %s7 = scalar_select 0, %s6, %s4
  loop: start=0, step=1, limit=4
  $region2: #{sn_conv_forward.1} parent=0 // loop_pre_header
    _
  $region3: #{sn_conv_forward.1} parent=0 // loop_header
    %s9 = sphi 0, %s13
    %p10 = scmp.ge.s32.totalorder %s9, 4
    %s17 = sphi 0, %s17
    %s19 = sphi 0, %s17
    %s20 = sphi 0, %s19
    %s34 = sphi 0, %s20
    %s38 = sphi 0, %s38
    %s40 = sphi 0, %s38
    %s41 = sphi 0, %s40
    %s55 = sphi 0, %s41
    %s61 = sphi 0, %s63
    %s64 = sphi 0, %s61
    %s65 = sphi 0, %s64
    %s81 = sphi 0, %s65
    %s87 = sphi 0, %s89
    %s90 = sphi 0, %s87
    %s91 = sphi 0, %s90
    %s107 = sphi 0, %s91
  $region4: #{sn_conv_forward.1} parent=0 // loop_header_branch
    %12 = sbr.rel (%p10) target = $region8
  $region5: #{sn_conv_forward.1} parent=0 // loop_body
    %s14 = ssub.s32 %s9, 1
    %s15 = ssub.s32 %s9, 2
    %s16 = sadd.s32 %s9, 1
    %s18 = sadd.s32 %s17, 1
    %p21 = scmp.eq.s32.totalorder %s9, 1
    %p22 = scmp.ne.s32.totalorder %s17, %s19
    %p23 = scmp.eq.s32.totalorder %s9, 0
    %p24 = por %p22, %p23
    %p25 = scmp.ne.s32.totalorder %s17, %s19
    %p26 = scmp.eq.s32.totalorder %s14, 1
    %p27 = por %p25, %p26
    %p28 = scmp.ne.s32.totalorder %s19, %s20
    %p29 = scmp.eq.s32.totalorder %s14, 0
    %p30 = por %p28, %p29
    %p31 = scmp.ne.s32.totalorder %s19, %s20
    %p32 = scmp.eq.s32.totalorder %s15, 1
    %p33 = por %p31, %p32
    %p35 = scmp.ne.s32.totalorder %s20, %s34
    %p36 = scmp.eq.s32.totalorder %s15, 0
    %p37 = por %p35, %p36
    %s39 = sadd.s32 %s38, 1
    %p42 = scmp.eq.s32.totalorder %s9, 1
    %p43 = scmp.ne.s32.totalorder %s38, %s40
    %p44 = scmp.eq.s32.totalorder %s9, 0
    %p45 = por %p43, %p44
    %p46 = scmp.ne.s32.totalorder %s38, %s40
    %p47 = scmp.eq.s32.totalorder %s14, 1
    %p48 = por %p46, %p47
    %p49 = scmp.ne.s32.totalorder %s40, %s41
    %p50 = scmp.eq.s32.totalorder %s14, 0
    %p51 = por %p49, %p50
    %p52 = scmp.ne.s32.totalorder %s40, %s41
    %p53 = scmp.eq.s32.totalorder %s15, 1
    %p54 = por %p52, %p53
    %p56 = scmp.ne.s32.totalorder %s41, %s55
    %p57 = scmp.eq.s32.totalorder %s15, 0
    %p58 = por %p56, %p57
    %s59 = ssub.s32 %s9, %s16
    %p60 = scmp.eq.s32.totalorder %s59, 0
    %s62 = sadd.s32 %s61, 1
    %s63 = scalar_select %p60, %s61, %s62
    %p66 = pneg %p60
    %p67 = scmp.eq.s32.totalorder %s9, 1
    %p68 = por %p66, %p67
    %p69 = scmp.ne.s32.totalorder %s61, %s64
    %p70 = scmp.eq.s32.totalorder %s9, 0
    %p71 = por %p69, %p70
    %p72 = scmp.ne.s32.totalorder %s61, %s64
    %p73 = scmp.eq.s32.totalorder %s14, 1
    %p74 = por %p72, %p73
    %p75 = scmp.ne.s32.totalorder %s64, %s65
    %p76 = scmp.eq.s32.totalorder %s14, 0
    %p77 = por %p75, %p76
    %p78 = scmp.ne.s32.totalorder %s64, %s65
    %p79 = scmp.eq.s32.totalorder %s15, 1
    %p80 = por %p78, %p79
    %p82 = scmp.ne.s32.totalorder %s65, %s81
    %p83 = scmp.eq.s32.totalorder %s15, 0
    %p84 = por %p82, %p83
    %s85 = ssub.s32 %s9, %s16
    %p86 = scmp.eq.s32.totalorder %s85, 0
    %s88 = sadd.s32 %s87, 1
    %s89 = scalar_select %p86, %s87, %s88
    %p92 = pneg %p86
    %p93 = scmp.eq.s32.totalorder %s9, 1
    %p94 = por %p92, %p93
    %p95 = scmp.ne.s32.totalorder %s87, %s90
    %p96 = scmp.eq.s32.totalorder %s9, 0
    %p97 = por %p95, %p96
    %p98 = scmp.ne.s32.totalorder %s87, %s90
    %p99 = scmp.eq.s32.totalorder %s14, 1
    %p100 = por %p98, %p99
    %p101 = scmp.ne.s32.totalorder %s90, %s91
    %p102 = scmp.eq.s32.totalorder %s14, 0
    %p103 = por %p101, %p102
    %p104 = scmp.ne.s32.totalorder %s90, %s91
    %p105 = scmp.eq.s32.totalorder %s15, 1
    %p106 = por %p104, %p105
    %p108 = scmp.ne.s32.totalorder %s91, %s107
    %p109 = scmp.eq.s32.totalorder %s15, 0
    %p110 = por %p108, %p109
    %p111 = scmp.le.s32.totalorder 1, %s9
    %p112 = scmp.lt.s32.totalorder %s9, 3
    %p113 = pnand %p111, %p112
    %p114 = pneg %p113
    // Predicated region
    $region9: #{sn_conv_forward.1} parent=5 // pred_check
      _
    $region10: #{sn_conv_forward.1} parent=5 // pred_check_branch
      %116 = sbr.rel (%p113) target = $region12
    $region11: #{sn_conv_forward.1} parent=5 // pred_region
      %s117 = ssub.s32 %s9, 1
      // Predicated region
      $region13: #{sn_conv_forward.1} parent=11 // pred_check
        %p118 = pneg %p30
      $region14: #{sn_conv_forward.1} parent=11 // pred_check_branch
        %120 = sbr.rel (%p118) target = $region16
      $region15: #{sn_conv_forward.1} parent=11 // pred_region
        _
      $region16: #{sn_conv_forward.1} parent=11 // pred_fallthru
        _
      // Predicated region
      $region17: #{sn_conv_forward.1} parent=11 // pred_check
        %p121 = pneg %p51
      $region18: #{sn_conv_forward.1} parent=11 // pred_check_branch
        %123 = sbr.rel (%p121) target = $region20
      $region19: #{sn_conv_forward.1} parent=11 // pred_region
        _
      $region20: #{sn_conv_forward.1} parent=11 // pred_fallthru
        _
    $region12: #{sn_conv_forward.1} parent=5 // pred_fallthru
      _
    %p124 = scmp.lt.s32.totalorder %s9, 2
    // Predicated region
    $region21: #{sn_conv_forward.1} parent=5 // pred_check
      %p125 = pneg %p124
    $region22: #{sn_conv_forward.1} parent=5 // pred_check_branch
      %127 = sbr.rel (%p125) target = $region24
    $region23: #{sn_conv_forward.1} parent=5 // pred_region
      // Predicated region
      $region25: #{sn_conv_forward.1} parent=23 // pred_check
        %p128 = pneg %p71
      $region26: #{sn_conv_forward.1} parent=23 // pred_check_branch
        %130 = sbr.rel (%p128) target = $region28
      $region27: #{sn_conv_forward.1} parent=23 // pred_region
        %p131 = scmp.lt.s32.totalorder %s9, 1
        %s132 = scalar_select %p131, %s9, 1
        %s133 = smul.addr %s132, 3
        %s134 = smul.addr %s133, 2
        %s135 = scalar_lea.vmem %s2, %s134
      $region28: #{sn_conv_forward.1} parent=23 // pred_fallthru
        _
    $region24: #{sn_conv_forward.1} parent=5 // pred_fallthru
      _
    %p136 = scmp.le.s32.totalorder 1, %s9
    %p137 = scmp.lt.s32.totalorder %s9, 3
    %p138 = pnand %p136, %p137
    %p139 = pneg %p138
    // Predicated region
    $region29: #{sn_conv_forward.1} parent=5 // pred_check
      _
    $region30: #{sn_conv_forward.1} parent=5 // pred_check_branch
      %141 = sbr.rel (%p138) target = $region32
    $region31: #{sn_conv_forward.1} parent=5 // pred_region
      %s142 = ssub.s32 %s9, 1
      %p143 = pneg %p30
      %p144 = pneg %p27
      %p145 = pneg %p51
      %p146 = pneg %p48
      %p147 = scmp.lt.s32.totalorder %s14, 1
      %s148 = scalar_select %p147, %s14, 1
      %s149 = smul.addr %s148, 3
      %s150 = smul.addr %s149, 2
      %s151 = scalar_lea.vmem %s2, %s150
      %p152 = pneg %p77
      %p153 = pneg %p74
      %p154 = pneg %p103
      %p155 = pneg %p100
      %p156 = scmp.lt.s32.totalorder %s14, 1
      %s157 = scalar_select %p156, %s14, 1
      %s158 = smul.addr %s157, 3
      %s159 = smul.addr %s158, 8
      %s160 = scalar_lea.vmem %s3, %s159
      %p161 = scmp.lt.s32.totalorder %s14, 1
      %s162 = scalar_select %p161, %s14, 1
      %s163 = smul.addr %s162, 3
      %s164 = smul.addr %s163, 2
      %s165 = scalar_lea.vmem %s2, %s164
      %p166 = scmp.lt.s32.totalorder %s14, 1
      %s167 = scalar_select %p166, %s14, 1
      %s168 = smul.addr %s167, 3
      %s169 = smul.addr %s168, 8
      %s170 = scalar_lea.vmem %s3, %s169
      %v172 = vld [vmem:[%s165] sm:$0x3f]
      %v173 = vld [vmem:[%s0] sm:$0xf]
      %s174 = scalar_lea.vmem %s0, 4
      %v175 = vld [vmem:[%s174] sm:$0xf]
      %177 = vst [vmem:[#allocation1] ss:$4 sm:$0xff] %v172
      %v178 = vld.sshfl [vmem:[#allocation1] sm:$0xff pattern:$0x73625140]
      %v180 = vld.sshfl [vmem:[#allocation1 + $0x8] sm:$0xff pattern:$0x73625140]
      %v182 = vld.sshfl [vmem:[#allocation1 + $0x10] sm:$0xff pattern:$0x73625140]
      %184 = vrot.lane.b32.xlu0 %v178, 127
      %v185 = vpop.permute.xlu0 %184
      %186 = vrot.lane.b32.xlu0 %v180, 127
      %v187 = vpop.permute.xlu0 %186
      %188 = vrot.lane.b32.xlu0 %v182, 127
      %v189 = vpop.permute.xlu0 %188
      %vm190 = vcmask 1039360
      %v191 = vsel %vm190, %v185, %v187
      %v192 = vsel %vm190, %v187, %v189
      %vm193 = vcmask 31744
      %v195 = vsel %vm193, %v175, 0
      %vm197 = vcmask 1041408
      %v199 = vsel %vm197, %v191, 0
      %v202 = vsel %vm197, %v192, 0
      %v205 = vsel %vm197, %v189, 0
      %207 = vmatpush.bf16.msra.mxu0 0
      %208 = vmatpush.bf16.msra.mxu0 0
      %209 = vmatpush.bf16.msra.mxu0 0
      %210 = vmatpush.bf16.msra.mxu0 0
      %211 = vmatpush.bf16.msra.mxu0 0
      %212 = vmatpush.bf16.msra.mxu0 0
      %213 = vmatpush.bf16.msra.mxu0 0
      %214 = vmatpush.bf16.msra.mxu0 %v199
      %215 = vmatmul.bf16.gmra.mxu0 %v195
      %v216 = vpop.f32.mrf.mxu0
      %v217 = vadd.f32 0.0, %v216
      %v218 = vpop.f32.mrf.mxu0
      %219 = vdwg.mxu0
      %220 = vmatpush.bf16.msra.mxu0 0
      %221 = vmatpush.bf16.msra.mxu0 0
      %222 = vmatpush.bf16.msra.mxu0 0
      %223 = vmatpush.bf16.msra.mxu0 0
      %224 = vmatpush.bf16.msra.mxu0 0
      %225 = vmatpush.bf16.msra.mxu0 0
      %226 = vmatpush.bf16.msra.mxu0 0
      %227 = vmatpush.bf16.msra.mxu0 %v202
      %228 = vmatmul.bf16.gmra.mxu0 %v195
      %v229 = vpop.f32.mrf.mxu0
      %v230 = vadd.f32 0.0, %v229
      %v231 = vpop.f32.mrf.mxu0
      %232 = vdwg.mxu0
      %233 = vmatpush.bf16.msra.mxu0 0
      %234 = vmatpush.bf16.msra.mxu0 0
      %235 = vmatpush.bf16.msra.mxu0 0
      %236 = vmatpush.bf16.msra.mxu0 0
      %237 = vmatpush.bf16.msra.mxu0 0
      %238 = vmatpush.bf16.msra.mxu0 0
      %239 = vmatpush.bf16.msra.mxu0 0
      %240 = vmatpush.bf16.msra.mxu0 %v205
      %241 = vmatmul.bf16.gmra.mxu0 %v195
      %v242 = vpop.f32.mrf.mxu0
      %v243 = vadd.f32 0.0, %v242
      %v244 = vpop.f32.mrf.mxu0
      %245 = vdwg.mxu0
      %246 = vst [vmem:[#allocation1] ss:$4 sm:$0xff] %v172
      %v247 = vld.sshfl [vmem:[#allocation1] sm:$0xff pattern:$0x73625140]
      %v248 = vld.sshfl [vmem:[#allocation1 + $0x8] sm:$0xff pattern:$0x73625140]
      %v249 = vld.sshfl [vmem:[#allocation1 + $0x10] sm:$0xff pattern:$0x73625140]
      %v251 = vsel %vm193, %v173, 0
      %v253 = vsel %vm197, %v247, 0
      %v255 = vsel %vm197, %v248, 0
      %v257 = vsel %vm197, %v249, 0
      %259 = vmatpush.bf16.msra.mxu0 0
      %260 = vmatpush.bf16.msra.mxu0 0
      %261 = vmatpush.bf16.msra.mxu0 0
      %262 = vmatpush.bf16.msra.mxu0 0
      %263 = vmatpush.bf16.msra.mxu0 0
      %264 = vmatpush.bf16.msra.mxu0 0
      %265 = vmatpush.bf16.msra.mxu0 0
      %266 = vmatpush.bf16.msra.mxu0 %v253
      %267 = vmatmul.bf16.gmra.mxu0 %v251
      %v268 = vpop.f32.mrf.mxu0
      %v269 = vadd.f32 %v217, %v268
      %v270 = vpop.f32.mrf.mxu0
      %271 = vdwg.mxu0
      %272 = vmatpush.bf16.msra.mxu0 0
      %273 = vmatpush.bf16.msra.mxu0 0
      %274 = vmatpush.bf16.msra.mxu0 0
      %275 = vmatpush.bf16.msra.mxu0 0
      %276 = vmatpush.bf16.msra.mxu0 0
      %277 = vmatpush.bf16.msra.mxu0 0
      %278 = vmatpush.bf16.msra.mxu0 0
      %279 = vmatpush.bf16.msra.mxu0 %v255
      %280 = vmatmul.bf16.gmra.mxu0 %v251
      %v281 = vpop.f32.mrf.mxu0
      %v282 = vadd.f32 %v230, %v281
      %v283 = vpop.f32.mrf.mxu0
      %284 = vdwg.mxu0
      %285 = vmatpush.bf16.msra.mxu0 0
      %286 = vmatpush.bf16.msra.mxu0 0
      %287 = vmatpush.bf16.msra.mxu0 0
      %288 = vmatpush.bf16.msra.mxu0 0
      %289 = vmatpush.bf16.msra.mxu0 0
      %290 = vmatpush.bf16.msra.mxu0 0
      %291 = vmatpush.bf16.msra.mxu0 0
      %292 = vmatpush.bf16.msra.mxu0 %v257
      %293 = vmatmul.bf16.gmra.mxu0 %v251
      %v294 = vpop.f32.mrf.mxu0
      %v295 = vadd.f32 %v243, %v294
      %v296 = vpop.f32.mrf.mxu0
      %297 = vdwg.mxu0
      %v298 = vld [vmem:[%s165] sm:$0x3f]
      %s299 = scalar_lea.vmem %s0, 8
      %v300 = vld [vmem:[%s299] sm:$0xf]
      %302 = vst [vmem:[#allocation1] ss:$4 sm:$0xff] %v298
      %v303 = vld.sshfl [vmem:[#allocation1] sm:$0xff pattern:$0x73625140]
      %v305 = vld.sshfl [vmem:[#allocation1 + $0x8] sm:$0xff pattern:$0x73625140]
      %v307 = vld.sshfl [vmem:[#allocation1 + $0x10] sm:$0xff pattern:$0x73625140]
      %309 = vrot.lane.b32.xlu0 %v303, 126
      %v310 = vpop.permute.xlu0 %309
      %311 = vrot.lane.b32.xlu0 %v305, 126
      %v312 = vpop.permute.xlu0 %311
      %313 = vrot.lane.b32.xlu0 %v307, 126
      %v314 = vpop.permute.xlu0 %313
      %vm315 = vcmask 1031168
      %v316 = vsel %vm315, %v310, %v312
      %v317 = vsel %vm315, %v312, %v314
      %v319 = vsel %vm193, %v300, 0
      %v322 = vsel %vm197, %v316, 0
      %v325 = vsel %vm197, %v317, 0
      %v328 = vsel %vm197, %v314, 0
      %330 = vmatpush.bf16.msra.mxu0 0
      %331 = vmatpush.bf16.msra.mxu0 0
      %332 = vmatpush.bf16.msra.mxu0 0
      %333 = vmatpush.bf16.msra.mxu0 0
      %334 = vmatpush.bf16.msra.mxu0 0
      %335 = vmatpush.bf16.msra.mxu0 0
      %336 = vmatpush.bf16.msra.mxu0 0
      %337 = vmatpush.bf16.msra.mxu0 %v322
      %338 = vmatmul.bf16.gmra.mxu0 %v319
      %v339 = vpop.f32.mrf.mxu0
      %v340 = vadd.f32 0.0, %v339
      %v341 = vpop.f32.mrf.mxu0
      %342 = vdwg.mxu0
      %343 = vmatpush.bf16.msra.mxu0 0
      %344 = vmatpush.bf16.msra.mxu0 0
      %345 = vmatpush.bf16.msra.mxu0 0
      %346 = vmatpush.bf16.msra.mxu0 0
      %347 = vmatpush.bf16.msra.mxu0 0
      %348 = vmatpush.bf16.msra.mxu0 0
      %349 = vmatpush.bf16.msra.mxu0 0
      %350 = vmatpush.bf16.msra.mxu0 %v325
      %351 = vmatmul.bf16.gmra.mxu0 %v319
      %v352 = vpop.f32.mrf.mxu0
      %v353 = vadd.f32 0.0, %v352
      %v354 = vpop.f32.mrf.mxu0
      %355 = vdwg.mxu0
      %356 = vmatpush.bf16.msra.mxu0 0
      %357 = vmatpush.bf16.msra.mxu0 0
      %358 = vmatpush.bf16.msra.mxu0 0
      %359 = vmatpush.bf16.msra.mxu0 0
      %360 = vmatpush.bf16.msra.mxu0 0
      %361 = vmatpush.bf16.msra.mxu0 0
      %362 = vmatpush.bf16.msra.mxu0 0
      %363 = vmatpush.bf16.msra.mxu0 %v328
      %364 = vmatmul.bf16.gmra.mxu0 %v319
      %v365 = vpop.f32.mrf.mxu0
      %v366 = vadd.f32 0.0, %v365
      %v367 = vpop.f32.mrf.mxu0
      %368 = vdwg.mxu0
      %v369 = vadd.f32 %v269, %v340
      %v370 = vadd.f32 %v282, %v353
      %v371 = vadd.f32 %v295, %v366
      %v372 = vld [vmem:[%s165] sm:$0x3f]
      %s373 = scalar_lea.vmem %s0, 12
      %v374 = vld [vmem:[%s373] sm:$0xf]
      %376 = vst [vmem:[#allocation1] ss:$4 sm:$0xff] %v372
      %v377 = vld.sshfl [vmem:[#allocation1] sm:$0xff pattern:$0x73625140]
      %v379 = vld.sshfl [vmem:[#allocation1 + $0x8] sm:$0xff pattern:$0x73625140]
      %v381 = vld.sshfl [vmem:[#allocation1 + $0x10] sm:$0xff pattern:$0x73625140]
      %383 = vrot.lane.b32.xlu0 %v377, 110
      %v384 = vpop.permute.xlu0 %383
      %385 = vrot.lane.b32.xlu0 %v379, 110
      %v386 = vpop.permute.xlu0 %385
      %387 = vrot.lane.b32.xlu0 %v381, 110
      %v388 = vpop.permute.xlu0 %387
      %vm389 = vcmask 900096
      %v390 = vsel %vm389, %v384, %v386
      %v391 = vsel %vm389, %v386, %v388
      %v393 = vsel %vm193, %v374, 0
      %v396 = vsel %vm197, %v390, 0
      %v399 = vsel %vm197, %v391, 0
      %v402 = vsel %vm197, %v388, 0
      %404 = vmatpush.bf16.msra.mxu0 0
      %405 = vmatpush.bf16.msra.mxu0 0
      %406 = vmatpush.bf16.msra.mxu0 0
      %407 = vmatpush.bf16.msra.mxu0 0
      %408 = vmatpush.bf16.msra.mxu0 0
      %409 = vmatpush.bf16.msra.mxu0 0
      %410 = vmatpush.bf16.msra.mxu0 0
      %411 = vmatpush.bf16.msra.mxu0 %v396
      %412 = vmatmul.bf16.gmra.mxu0 %v393
      %v413 = vpop.f32.mrf.mxu0
      %v414 = vadd.f32 0.0, %v413
      %v415 = vpop.f32.mrf.mxu0
      %416 = vdwg.mxu0
      %417 = vmatpush.bf16.msra.mxu0 0
      %418 = vmatpush.bf16.msra.mxu0 0
      %419 = vmatpush.bf16.msra.mxu0 0
      %420 = vmatpush.bf16.msra.mxu0 0
      %421 = vmatpush.bf16.msra.mxu0 0
      %422 = vmatpush.bf16.msra.mxu0 0
      %423 = vmatpush.bf16.msra.mxu0 0
      %424 = vmatpush.bf16.msra.mxu0 %v399
      %425 = vmatmul.bf16.gmra.mxu0 %v393
      %v426 = vpop.f32.mrf.mxu0
      %v427 = vadd.f32 0.0, %v426
      %v428 = vpop.f32.mrf.mxu0
      %429 = vdwg.mxu0
      %430 = vmatpush.bf16.msra.mxu0 0
      %431 = vmatpush.bf16.msra.mxu0 0
      %432 = vmatpush.bf16.msra.mxu0 0
      %433 = vmatpush.bf16.msra.mxu0 0
      %434 = vmatpush.bf16.msra.mxu0 0
      %435 = vmatpush.bf16.msra.mxu0 0
      %436 = vmatpush.bf16.msra.mxu0 0
      %437 = vmatpush.bf16.msra.mxu0 %v402
      %438 = vmatmul.bf16.gmra.mxu0 %v393
      %v439 = vpop.f32.mrf.mxu0
      %v440 = vadd.f32 0.0, %v439
      %v441 = vpop.f32.mrf.mxu0
      %442 = vdwg.mxu0
      %v443 = vadd.f32 %v369, %v414
      %v444 = vadd.f32 %v370, %v427
      %v445 = vadd.f32 %v371, %v440
      %v446 = vld [vmem:[%s165] sm:$0x3f]
      %s447 = scalar_lea.vmem %s0, 16
      %v448 = vld [vmem:[%s447] sm:$0xf]
      %450 = vst [vmem:[#allocation1] ss:$4 sm:$0xff] %v446
      %v451 = vld.sshfl [vmem:[#allocation1] sm:$0xff pattern:$0x73625140]
      %v453 = vld.sshfl [vmem:[#allocation1 + $0x8] sm:$0xff pattern:$0x73625140]
      %v455 = vld.sshfl [vmem:[#allocation1 + $0x10] sm:$0xff pattern:$0x73625140]
      %457 = vrot.lane.b32.xlu0 %v451, 109
      %v458 = vpop.permute.xlu0 %457
      %459 = vrot.lane.b32.xlu0 %v453, 109
      %v460 = vpop.permute.xlu0 %459
      %461 = vrot.lane.b32.xlu0 %v455, 109
      %v462 = vpop.permute.xlu0 %461
      %vm463 = vcmask 891904
      %v464 = vsel %vm463, %v458, %v460
      %v465 = vsel %vm463, %v460, %v462
      %v467 = vsel %vm193, %v448, 0
      %v470 = vsel %vm197, %v464, 0
      %v473 = vsel %vm197, %v465, 0
      %v476 = vsel %vm197, %v462, 0
      %478 = vmatpush.bf16.msra.mxu0 0
      %479 = vmatpush.bf16.msra.mxu0 0
      %480 = vmatpush.bf16.msra.mxu0 0
      %481 = vmatpush.bf16.msra.mxu0 0
      %482 = vmatpush.bf16.msra.mxu0 0
      %483 = vmatpush.bf16.msra.mxu0 0
      %484 = vmatpush.bf16.msra.mxu0 0
      %485 = vmatpush.bf16.msra.mxu0 %v470
      %486 = vmatmul.bf16.gmra.mxu0 %v467
      %v487 = vpop.f32.mrf.mxu0
      %v488 = vadd.f32 0.0, %v487
      %v489 = vpop.f32.mrf.mxu0
      %490 = vdwg.mxu0
      %491 = vmatpush.bf16.msra.mxu0 0
      %492 = vmatpush.bf16.msra.mxu0 0
      %493 = vmatpush.bf16.msra.mxu0 0
      %494 = vmatpush.bf16.msra.mxu0 0
      %495 = vmatpush.bf16.msra.mxu0 0
      %496 = vmatpush.bf16.msra.mxu0 0
      %497 = vmatpush.bf16.msra.mxu0 0
      %498 = vmatpush.bf16.msra.mxu0 %v473
      %499 = vmatmul.bf16.gmra.mxu0 %v467
      %v500 = vpop.f32.mrf.mxu0
      %v501 = vadd.f32 0.0, %v500
      %v502 = vpop.f32.mrf.mxu0
      %503 = vdwg.mxu0
      %504 = vmatpush.bf16.msra.mxu0 0
      %505 = vmatpush.bf16.msra.mxu0 0
      %506 = vmatpush.bf16.msra.mxu0 0
      %507 = vmatpush.bf16.msra.mxu0 0
      %508 = vmatpush.bf16.msra.mxu0 0
      %509 = vmatpush.bf16.msra.mxu0 0
      %510 = vmatpush.bf16.msra.mxu0 0
      %511 = vmatpush.bf16.msra.mxu0 %v476
      %512 = vmatmul.bf16.gmra.mxu0 %v467
      %v513 = vpop.f32.mrf.mxu0
      %v514 = vadd.f32 0.0, %v513
      %v515 = vpop.f32.mrf.mxu0
      %516 = vdwg.mxu0
      %v517 = vadd.f32 %v443, %v488
      %v518 = vadd.f32 %v444, %v501
      %v519 = vadd.f32 %v445, %v514
      %v520 = vld [vmem:[%s165] sm:$0x3f]
      %s521 = scalar_lea.vmem %s0, 20
      %v522 = vld [vmem:[%s521] sm:$0xf]
      %524 = vst [vmem:[#allocation1] ss:$4 sm:$0xff] %v520
      %v525 = vld.sshfl [vmem:[#allocation1] sm:$0xff pattern:$0x73625140]
      %v527 = vld.sshfl [vmem:[#allocation1 + $0x8] sm:$0xff pattern:$0x73625140]
      %v529 = vld.sshfl [vmem:[#allocation1 + $0x10] sm:$0xff pattern:$0x73625140]
      %531 = vrot.lane.b32.xlu0 %v525, 108
      %v532 = vpop.permute.xlu0 %531
      %533 = vrot.lane.b32.xlu0 %v527, 108
      %v534 = vpop.permute.xlu0 %533
      %535 = vrot.lane.b32.xlu0 %v529, 108
      %v536 = vpop.permute.xlu0 %535
      %vm537 = vcmask 883712
      %v538 = vsel %vm537, %v532, %v534
      %v539 = vsel %vm537, %v534, %v536
      %v541 = vsel %vm193, %v522, 0
      %v544 = vsel %vm197, %v538, 0
      %v547 = vsel %vm197, %v539, 0
      %v550 = vsel %vm197, %v536, 0
      %552 = vmatpush.bf16.msra.mxu0 0
      %553 = vmatpush.bf16.msra.mxu0 0
      %554 = vmatpush.bf16.msra.mxu0 0
      %555 = vmatpush.bf16.msra.mxu0 0
      %556 = vmatpush.bf16.msra.mxu0 0
      %557 = vmatpush.bf16.msra.mxu0 0
      %558 = vmatpush.bf16.msra.mxu0 0
      %559 = vmatpush.bf16.msra.mxu0 %v544
      %560 = vmatmul.bf16.gmra.mxu0 %v541
      %v561 = vpop.f32.mrf.mxu0
      %v562 = vadd.f32 0.0, %v561
      %v563 = vpop.f32.mrf.mxu0
      %564 = vdwg.mxu0
      %565 = vmatpush.bf16.msra.mxu0 0
      %566 = vmatpush.bf16.msra.mxu0 0
      %567 = vmatpush.bf16.msra.mxu0 0
      %568 = vmatpush.bf16.msra.mxu0 0
      %569 = vmatpush.bf16.msra.mxu0 0
      %570 = vmatpush.bf16.msra.mxu0 0
      %571 = vmatpush.bf16.msra.mxu0 0
      %572 = vmatpush.bf16.msra.mxu0 %v547
      %573 = vmatmul.bf16.gmra.mxu0 %v541
      %v574 = vpop.f32.mrf.mxu0
      %v575 = vadd.f32 0.0, %v574
      %v576 = vpop.f32.mrf.mxu0
      %577 = vdwg.mxu0
      %578 = vmatpush.bf16.msra.mxu0 0
      %579 = vmatpush.bf16.msra.mxu0 0
      %580 = vmatpush.bf16.msra.mxu0 0
      %581 = vmatpush.bf16.msra.mxu0 0
      %582 = vmatpush.bf16.msra.mxu0 0
      %583 = vmatpush.bf16.msra.mxu0 0
      %584 = vmatpush.bf16.msra.mxu0 0
      %585 = vmatpush.bf16.msra.mxu0 %v550
      %586 = vmatmul.bf16.gmra.mxu0 %v541
      %v587 = vpop.f32.mrf.mxu0
      %v588 = vadd.f32 0.0, %v587
      %v589 = vpop.f32.mrf.mxu0
      %590 = vdwg.mxu0
      %v591 = vadd.f32 %v517, %v562
      %v592 = vadd.f32 %v518, %v575
      %v593 = vadd.f32 %v519, %v588
      %v594 = vld [vmem:[%s165] sm:$0x3f]
      %s595 = scalar_lea.vmem %s0, 24
      %v596 = vld [vmem:[%s595] sm:$0xf]
      %598 = vst [vmem:[#allocation1] ss:$4 sm:$0xff] %v594
      %v599 = vld.sshfl [vmem:[#allocation1] sm:$0xff pattern:$0x73625140]
      %v601 = vld.sshfl [vmem:[#allocation1 + $0x8] sm:$0xff pattern:$0x73625140]
      %v603 = vld.sshfl [vmem:[#allocation1 + $0x10] sm:$0xff pattern:$0x73625140]
      %605 = vrot.lane.b32.xlu0 %v599, 92
      %v606 = vpop.permute.xlu0 %605
      %607 = vrot.lane.b32.xlu0 %v601, 92
      %v608 = vpop.permute.xlu0 %607
      %609 = vrot.lane.b32.xlu0 %v603, 92
      %v610 = vpop.permute.xlu0 %609
      %vm611 = vcmask 752640
      %v612 = vsel %vm611, %v606, %v608
      %v613 = vsel %vm611, %v608, %v610
      %v615 = vsel %vm193, %v596, 0
      %v618 = vsel %vm197, %v612, 0
      %v621 = vsel %vm197, %v613, 0
      %v624 = vsel %vm197, %v610, 0
      %626 = vmatpush.bf16.msra.mxu0 0
      %627 = vmatpush.bf16.msra.mxu0 0
      %628 = vmatpush.bf16.msra.mxu0 0
      %629 = vmatpush.bf16.msra.mxu0 0
      %630 = vmatpush.bf16.msra.mxu0 0
      %631 = vmatpush.bf16.msra.mxu0 0
      %632 = vmatpush.bf16.msra.mxu0 0
      %633 = vmatpush.bf16.msra.mxu0 %v618
      %634 = vmatmul.bf16.gmra.mxu0 %v615
      %v635 = vpop.f32.mrf.mxu0
      %v636 = vadd.f32 0.0, %v635
      %v637 = vpop.f32.mrf.mxu0
      %638 = vdwg.mxu0
      %639 = vmatpush.bf16.msra.mxu0 0
      %640 = vmatpush.bf16.msra.mxu0 0
      %641 = vmatpush.bf16.msra.mxu0 0
      %642 = vmatpush.bf16.msra.mxu0 0
      %643 = vmatpush.bf16.msra.mxu0 0
      %644 = vmatpush.bf16.msra.mxu0 0
      %645 = vmatpush.bf16.msra.mxu0 0
      %646 = vmatpush.bf16.msra.mxu0 %v621
      %647 = vmatmul.bf16.gmra.mxu0 %v615
      %v648 = vpop.f32.mrf.mxu0
      %v649 = vadd.f32 0.0, %v648
      %v650 = vpop.f32.mrf.mxu0
      %651 = vdwg.mxu0
      %652 = vmatpush.bf16.msra.mxu0 0
      %653 = vmatpush.bf16.msra.mxu0 0
      %654 = vmatpush.bf16.msra.mxu0 0
      %655 = vmatpush.bf16.msra.mxu0 0
      %656 = vmatpush.bf16.msra.mxu0 0
      %657 = vmatpush.bf16.msra.mxu0 0
      %658 = vmatpush.bf16.msra.mxu0 0
      %659 = vmatpush.bf16.msra.mxu0 %v624
      %660 = vmatmul.bf16.gmra.mxu0 %v615
      %v661 = vpop.f32.mrf.mxu0
      %v662 = vadd.f32 0.0, %v661
      %v663 = vpop.f32.mrf.mxu0
      %664 = vdwg.mxu0
      %v665 = vadd.f32 %v591, %v636
      %v666 = vadd.f32 %v592, %v649
      %v667 = vadd.f32 %v593, %v662
      %v668 = vld [vmem:[%s165] sm:$0x3f]
      %s669 = scalar_lea.vmem %s0, 28
      %v670 = vld [vmem:[%s669] sm:$0xf]
      %672 = vst [vmem:[#allocation1] ss:$4 sm:$0xff] %v668
      %v673 = vld.sshfl [vmem:[#allocation1] sm:$0xff pattern:$0x73625140]
      %v675 = vld.sshfl [vmem:[#allocation1 + $0x8] sm:$0xff pattern:$0x73625140]
      %v677 = vld.sshfl [vmem:[#allocation1 + $0x10] sm:$0xff pattern:$0x73625140]
      %679 = vrot.lane.b32.xlu0 %v673, 91
      %v680 = vpop.permute.xlu0 %679
      %681 = vrot.lane.b32.xlu0 %v675, 91
      %v682 = vpop.permute.xlu0 %681
      %683 = vrot.lane.b32.xlu0 %v677, 91
      %v684 = vpop.permute.xlu0 %683
      %vm685 = vcmask 744448
      %v686 = vsel %vm685, %v680, %v682
      %v687 = vsel %vm685, %v682, %v684
      %v689 = vsel %vm193, %v670, 0
      %v692 = vsel %vm197, %v686, 0
      %v695 = vsel %vm197, %v687, 0
      %v698 = vsel %vm197, %v684, 0
      %700 = vmatpush.bf16.msra.mxu0 0
      %701 = vmatpush.bf16.msra.mxu0 0
      %702 = vmatpush.bf16.msra.mxu0 0
      %703 = vmatpush.bf16.msra.mxu0 0
      %704 = vmatpush.bf16.msra.mxu0 0
      %705 = vmatpush.bf16.msra.mxu0 0
      %706 = vmatpush.bf16.msra.mxu0 0
      %707 = vmatpush.bf16.msra.mxu0 %v692
      %708 = vmatmul.bf16.gmra.mxu0 %v689
      %v709 = vpop.f32.mrf.mxu0
      %v710 = vadd.f32 0.0, %v709
      %v711 = vpop.f32.mrf.mxu0
      %712 = vdwg.mxu0
      %713 = vmatpush.bf16.msra.mxu0 0
      %714 = vmatpush.bf16.msra.mxu0 0
      %715 = vmatpush.bf16.msra.mxu0 0
      %716 = vmatpush.bf16.msra.mxu0 0
      %717 = vmatpush.bf16.msra.mxu0 0
      %718 = vmatpush.bf16.msra.mxu0 0
      %719 = vmatpush.bf16.msra.mxu0 0
      %720 = vmatpush.bf16.msra.mxu0 %v695
      %721 = vmatmul.bf16.gmra.mxu0 %v689
      %v722 = vpop.f32.mrf.mxu0
      %v723 = vadd.f32 0.0, %v722
      %v724 = vpop.f32.mrf.mxu0
      %725 = vdwg.mxu0
      %726 = vmatpush.bf16.msra.mxu0 0
      %727 = vmatpush.bf16.msra.mxu0 0
      %728 = vmatpush.bf16.msra.mxu0 0
      %729 = vmatpush.bf16.msra.mxu0 0
      %730 = vmatpush.bf16.msra.mxu0 0
      %731 = vmatpush.bf16.msra.mxu0 0
      %732 = vmatpush.bf16.msra.mxu0 0
      %733 = vmatpush.bf16.msra.mxu0 %v698
      %734 = vmatmul.bf16.gmra.mxu0 %v689
      %v735 = vpop.f32.mrf.mxu0
      %v736 = vadd.f32 0.0, %v735
      %v737 = vpop.f32.mrf.mxu0
      %738 = vdwg.mxu0
      %v739 = vadd.f32 %v665, %v710
      %v740 = vadd.f32 %v666, %v723
      %v741 = vadd.f32 %v667, %v736
      %v742 = vld [vmem:[%s165] sm:$0x3f]
      %s743 = scalar_lea.vmem %s0, 32
      %v744 = vld [vmem:[%s743] sm:$0xf]
      %746 = vst [vmem:[#allocation1] ss:$4 sm:$0xff] %v742
      %v747 = vld.sshfl [vmem:[#allocation1] sm:$0xff pattern:$0x73625140]
      %v749 = vld.sshfl [vmem:[#allocation1 + $0x8] sm:$0xff pattern:$0x73625140]
      %v751 = vld.sshfl [vmem:[#allocation1 + $0x10] sm:$0xff pattern:$0x73625140]
      %753 = vrot.lane.b32.xlu0 %v747, 90
      %v754 = vpop.permute.xlu0 %753
      %755 = vrot.lane.b32.xlu0 %v749, 90
      %v756 = vpop.permute.xlu0 %755
      %757 = vrot.lane.b32.xlu0 %v751, 90
      %v758 = vpop.permute.xlu0 %757
      %vm759 = vcmask 736256
      %v760 = vsel %vm759, %v754, %v756
      %v761 = vsel %vm759, %v756, %v758
      %v763 = vsel %vm193, %v744, 0
      %v766 = vsel %vm197, %v760, 0
      %v769 = vsel %vm197, %v761, 0
      %v772 = vsel %vm197, %v758, 0
      %774 = vmatpush.bf16.msra.mxu0 0
      %775 = vmatpush.bf16.msra.mxu0 0
      %776 = vmatpush.bf16.msra.mxu0 0
      %777 = vmatpush.bf16.msra.mxu0 0
      %778 = vmatpush.bf16.msra.mxu0 0
      %779 = vmatpush.bf16.msra.mxu0 0
      %780 = vmatpush.bf16.msra.mxu0 0
      %781 = vmatpush.bf16.msra.mxu0 %v766
      %782 = vmatmul.bf16.gmra.mxu0 %v763
      %v783 = vpop.f32.mrf.mxu0
      %v784 = vadd.f32 0.0, %v783
      %v785 = vpop.f32.mrf.mxu0
      %786 = vdwg.mxu0
      %787 = vmatpush.bf16.msra.mxu0 0
      %788 = vmatpush.bf16.msra.mxu0 0
      %789 = vmatpush.bf16.msra.mxu0 0
      %790 = vmatpush.bf16.msra.mxu0 0
      %791 = vmatpush.bf16.msra.mxu0 0
      %792 = vmatpush.bf16.msra.mxu0 0
      %793 = vmatpush.bf16.msra.mxu0 0
      %794 = vmatpush.bf16.msra.mxu0 %v769
      %795 = vmatmul.bf16.gmra.mxu0 %v763
      %v796 = vpop.f32.mrf.mxu0
      %v797 = vadd.f32 0.0, %v796
      %v798 = vpop.f32.mrf.mxu0
      %799 = vdwg.mxu0
      %800 = vmatpush.bf16.msra.mxu0 0
      %801 = vmatpush.bf16.msra.mxu0 0
      %802 = vmatpush.bf16.msra.mxu0 0
      %803 = vmatpush.bf16.msra.mxu0 0
      %804 = vmatpush.bf16.msra.mxu0 0
      %805 = vmatpush.bf16.msra.mxu0 0
      %806 = vmatpush.bf16.msra.mxu0 0
      %807 = vmatpush.bf16.msra.mxu0 %v772
      %808 = vmatmul.bf16.gmra.mxu0 %v763
      %v809 = vpop.f32.mrf.mxu0
      %v810 = vadd.f32 0.0, %v809
      %v811 = vpop.f32.mrf.mxu0
      %812 = vdwg.mxu0
      %v813 = vadd.f32 %v739, %v784
      %v814 = vadd.f32 %v740, %v797
      %v815 = vadd.f32 %v741, %v810
      %v816 = vld [vmem:[%s1] sm:$0xff]
      %818 = vset.pattern.permute.xlu0 0
      %819 = vperm.xlu0 %818, %v816
      %v820 = vpop.permute.xlu0 %819
      %v822 = vadd.f32 %v813, %v820
      %v823 = vadd.f32 %v814, %v820
      %v824 = vadd.f32 %v815, %v820
      %vm825 = vcmp.ge.f32.partialorder %v822, 0.0
      %vm826 = vcmp.ge.f32.partialorder %v823, 0.0
      %vm827 = vcmp.ge.f32.partialorder %v824, 0.0
      %v828 = vmul.f32 %v822, 0.2
      %v829 = vmul.f32 %v823, 0.2
      %v830 = vmul.f32 %v824, 0.2
      %v831 = vsel %vm825, %v822, %v828
      %v832 = vsel %vm826, %v823, %v829
      %v833 = vsel %vm827, %v824, %v830
      %834 = vst [vmem:[%s170] sm:$0xff] %v831
      %835 = vst [vmem:[%s170 + $0x8] sm:$0xff] %v832
      %vm836 = vcmask 261120
      %837 = vst.msk [vmem:[%s170 + $0x10] sm:$0xff] %vm836, %v833
      %p838 = scmp.lt.s32.totalorder %s14, 1
      %s839 = scalar_select %p838, %s14, 1
      %s840 = smul.addr %s839, 3
      %s841 = smul.addr %s840, 8
      %s842 = scalar_lea.vmem %s3, %s841
      // Predicated region
      $region33: #{sn_conv_forward.1} parent=31 // pred_check
        %p843 = pneg %p100
      $region34: #{sn_conv_forward.1} parent=31 // pred_check_branch
        %845 = sbr.rel (%p843) target = $region36
      $region35: #{sn_conv_forward.1} parent=31 // pred_region
        _
      $region36: #{sn_conv_forward.1} parent=31 // pred_fallthru
        _
    $region32: #{sn_conv_forward.1} parent=5 // pred_fallthru
      _
    %p846 = scmp.le.s32.totalorder 2, %s9
    // Predicated region
    $region37: #{sn_conv_forward.1} parent=5 // pred_check
      %p847 = pneg %p846
    $region38: #{sn_conv_forward.1} parent=5 // pred_check_branch
      %849 = sbr.rel (%p847) target = $region40
    $region39: #{sn_conv_forward.1} parent=5 // pred_region
      %s850 = ssub.s32 %s9, 2
      // Predicated region
      $region41: #{sn_conv_forward.1} parent=39 // pred_check
        %p851 = pneg %p106
      $region42: #{sn_conv_forward.1} parent=39 // pred_check_branch
        %853 = sbr.rel (%p851) target = $region44
      $region43: #{sn_conv_forward.1} parent=39 // pred_region
        %p854 = scmp.lt.s32.totalorder %s15, 1
        %s855 = scalar_select %p854, %s15, 1
        %s856 = smul.addr %s855, 3
        %s857 = smul.addr %s856, 8
        %s858 = scalar_lea.vmem %s3, %s857
      $region44: #{sn_conv_forward.1} parent=39 // pred_fallthru
        _
    $region40: #{sn_conv_forward.1} parent=5 // pred_fallthru
      _
  $region6: #{sn_conv_forward.1} parent=0 // loop_footer
    %s13 = sadd.s32 1, %s9
  $region7: #{sn_conv_forward.1} parent=0 // loop_footer_branch
    %8 = sbr.rel target = $region3
  $region8: #{sn_conv_forward.1} parent=0 // loop_exit
    _

</llo_original>
